<compile_context>
chip_gen: v7x
topology: tpu7x:2x2x1
jax: 0.10.0
libtpu: 0.0.40
codegen_flags: <defaults>
</compile_context>

<pallas_src>
import jax
import jax.numpy as jnp
import numpy as np
from jax.experimental import pallas as pl
from jax.experimental.pallas import tpu as pltpu


def principle_head_kernel(xt_ref, w1t_ref, b1_ref, w2_ref, b2_ref, o_ref):
    # xt_ref : (H, TB)  bf16   -- one batch tile, batch on lanes
    # w1t_ref: (Hh, H)  bf16   -- layer-1 weight, pre-transposed (out, in)
    # b1_ref : (Hh, 1)  f32
    # w2_ref : (Hh, 1)  f32    -- layer-2 weight column
    # b2_ref : (1, 1)   f32
    # o_ref  : (1, TB)  f32    -- lane-dense output row
    # Layer 1: MXU matmul, bf16 inputs, f32 accumulation; bias + ReLU on the VPU.
    h = jnp.dot(w1t_ref[...], xt_ref[...], preferred_element_type=jnp.float32)  # (Hh, TB)
    h = jnp.maximum(h + b1_ref[...], 0.0)
    # Dropout: inference semantics -> identity (no scaling, no masking).
    # TODO(synk): training-mode dropout (pltpu.prng_seed + pltpu.prng_random_bits mask) not implemented.
    # Layer 2 (output width 1): keep it off the MXU -- VPU multiply + sublane reduction.
    y = jnp.sum(h * w2_ref[...], axis=0, keepdims=True) + b2_ref[...]           # (1, TB)
    o_ref[...] = jax.nn.sigmoid(y).astype(o_ref.dtype)


def _round_up(x: int, m: int) -> int:
    return ((x + m - 1) // m) * m


def principle_head(x, w1, b1, w2, b2, *, tb=512):
    """sigmoid(relu(x @ w1 + b1) @ w2 + b2) with eval-mode dropout (identity).

    x : (B, H) float32
    w1: (H, Hh)   b1: (1, Hh)
    w2: (Hh, 1)   b2: (1, 1)
    returns (B, 1) float32
    """
    B, H = x.shape
    Hh = w1.shape[1]

    # Batch tile: lane-dense (multiple of 128), but no bigger than the padded batch.
    tb = max(128, (tb // 128) * 128)
    tb = min(tb, _round_up(B, 128))
    Bp = _round_up(B, tb)
    num_tiles = Bp // tb

    # Wrapper-side layout plumbing (free): batch onto lanes, bf16 matmul inputs,
    # weights pre-transposed to (out, in), biases as columns.
    xt = jnp.pad(x.astype(jnp.bfloat16).T, ((0, 0), (0, Bp - B)))     # (H, Bp) bf16
    w1t = w1.T.astype(jnp.bfloat16)                                   # (Hh, H) bf16
    b1c = jnp.reshape(b1, (Hh, 1)).astype(jnp.float32)                # (Hh, 1)
    w2c = jnp.reshape(w2, (Hh, 1)).astype(jnp.float32)                # (Hh, 1)
    b2c = jnp.reshape(b2, (1, 1)).astype(jnp.float32)                 # (1, 1)

    out = pl.pallas_call(
        principle_head_kernel,
        out_shape=jax.ShapeDtypeStruct((1, Bp), jnp.float32),
        grid_spec=pl.GridSpec(
            grid=(num_tiles,),
            in_specs=[
                pl.BlockSpec((H, tb), lambda i: (0, i)),    # x tile, pipelined over batch
                pl.BlockSpec((Hh, H), lambda i: (0, 0)),    # resident weights / biases
                pl.BlockSpec((Hh, 1), lambda i: (0, 0)),
                pl.BlockSpec((Hh, 1), lambda i: (0, 0)),
                pl.BlockSpec((1, 1), lambda i: (0, 0)),
            ],
            out_specs=pl.BlockSpec((1, tb), lambda i: (0, i)),        # lane-dense output row
        ),
        compiler_params=pltpu.CompilerParams(
            # Independent batch tiles -> shard across both TensorCores on v7x.
            dimension_semantics=("parallel",),
        ),
    )(xt, w1t, b1c, w2c, b2c)

    return out[:, :B].T                                               # (B, 1)


if __name__ == "__main__":
    hidden_size = 32
    batch = 8

    key = jax.random.PRNGKey(0)
    kx, kw1, kb1, kw2, kb2 = jax.random.split(key, 5)

    # Deterministic synthetic parameters (shapes match nn.Linear(H, H//2), nn.Linear(H//2, 1)),
    # stored transposed relative to PyTorch's (out, in) convention: here (in, out).
    x = jax.random.normal(kx, (batch, hidden_size), dtype=jnp.float32)
    w1 = jax.random.normal(kw1, (hidden_size, hidden_size // 2), dtype=jnp.float32) * 0.1
    b1 = jax.random.normal(kb1, (1, hidden_size // 2), dtype=jnp.float32) * 0.1
    w2 = jax.random.normal(kw2, (hidden_size // 2, 1), dtype=jnp.float32) * 0.1
    b2 = jax.random.normal(kb2, (1, 1), dtype=jnp.float32) * 0.1

    out = jax.block_until_ready(principle_head(x, w1, b1, w2, b2))
    assert out.shape == (batch, 1)

    # Reference: exact float64 math on the same bf16-quantized matmul inputs the kernel uses.
    xr = np.asarray(x.astype(jnp.bfloat16).astype(jnp.float32), np.float64)
    w1r = np.asarray(w1.astype(jnp.bfloat16).astype(jnp.float32), np.float64)
    b1r = np.asarray(b1, np.float64)
    w2r = np.asarray(w2, np.float64)
    b2r = np.asarray(b2, np.float64)
    h_ref = np.maximum(xr @ w1r + b1r, 0.0)
    ref = 1.0 / (1.0 + np.exp(-(h_ref @ w2r + b2r)))

    np.testing.assert_allclose(np.asarray(out, np.float64), ref, rtol=1e-3, atol=1e-4)
    print("KERNEL_OK")
</pallas_src>

<mosaic_0001>
module attributes {stable_mosaic.version = 11 : i64} {
  func.func @principle_head_kernel(%arg0: i32, %arg1: memref<32x128xbf16, #tpu.memory_space<vmem>>, %arg2: memref<16x32xbf16, #tpu.memory_space<vmem>>, %arg3: memref<16x1xf32, #tpu.memory_space<vmem>>, %arg4: memref<16x1xf32, #tpu.memory_space<vmem>>, %arg5: memref<1x1xf32, #tpu.memory_space<vmem>>, %arg6: memref<1x128xf32, #tpu.memory_space<vmem>>) attributes {dimension_semantics = [#tpu.dimension_semantics<parallel>], iteration_bounds = array<i64: 1>, scalar_prefetch = 0 : i64, scratch_operands = 0 : i64, tpu.core_type = #tpu.core_type<tc>, window_params = [{transform_indices = @transform_0, window_bounds = array<i64: 32, 128>}, {pipeline_mode = #tpu.pipeline_mode<synchronous>, transform_indices = @transform_1, window_bounds = array<i64: 16, 32>}, {pipeline_mode = #tpu.pipeline_mode<synchronous>, transform_indices = @transform_2, window_bounds = array<i64: 16, 1>}, {pipeline_mode = #tpu.pipeline_mode<synchronous>, transform_indices = @transform_3, window_bounds = array<i64: 16, 1>}, {pipeline_mode = #tpu.pipeline_mode<synchronous>, transform_indices = @transform_4, window_bounds = array<i64: 1, 1>}, {transform_indices = @transform_5, window_bounds = array<i64: 1, 128>}]} {
    %c0 = arith.constant 0 : index
    %c0_0 = arith.constant 0 : index
    %0 = vector.load %arg2[%c0, %c0_0] : memref<16x32xbf16, #tpu.memory_space<vmem>>, vector<16x32xbf16>
    %c0_1 = arith.constant 0 : index
    %c0_2 = arith.constant 0 : index
    %1 = vector.load %arg1[%c0_1, %c0_2] : memref<32x128xbf16, #tpu.memory_space<vmem>>, vector<32x128xbf16>
    %cst = arith.constant dense<0.000000e+00> : vector<16x128xf32>
    %2 = tpu.matmul %0, %1, %cst {dimension_numbers = #tpu.dot_dimension_numbers<[1], [0], [0], [1], [0, 0, 1, 1], [], []>} : vector<16x32xbf16>, vector<32x128xbf16>, vector<16x128xf32> -> vector<16x128xf32>
    %c0_3 = arith.constant 0 : index
    %c0_4 = arith.constant 0 : index
    %3 = vector.load %arg3[%c0_3, %c0_4] : memref<16x1xf32, #tpu.memory_space<vmem>>, vector<16x1xf32>
    %4 = vector.broadcast %3 : vector<16x1xf32> to vector<16x128xf32>
    %5 = arith.addf %2, %4 : vector<16x128xf32>
    %cst_5 = arith.constant 0.000000e+00 : f32
    %6 = vector.broadcast %cst_5 : f32 to vector<16x128xf32>
    %7 = arith.maximumf %5, %6 : vector<16x128xf32>
    %c0_6 = arith.constant 0 : index
    %c0_7 = arith.constant 0 : index
    %8 = vector.load %arg4[%c0_6, %c0_7] : memref<16x1xf32, #tpu.memory_space<vmem>>, vector<16x1xf32>
    %9 = vector.broadcast %8 : vector<16x1xf32> to vector<16x128xf32>
    %10 = arith.mulf %7, %9 : vector<16x128xf32>
    %cst_8 = arith.constant dense<0.000000e+00> : vector<128xf32>
    %11 = vector.multi_reduction <add>, %10, %cst_8 [0] : vector<16x128xf32> to vector<128xf32>
    %12 = vector.shape_cast %11 : vector<128xf32> to vector<1x128xf32>
    %c0_9 = arith.constant 0 : index
    %c0_10 = arith.constant 0 : index
    %13 = vector.load %arg5[%c0_9, %c0_10] : memref<1x1xf32, #tpu.memory_space<vmem>>, vector<1x1xf32>
    %14 = vector.broadcast %13 : vector<1x1xf32> to vector<1x128xf32>
    %15 = arith.addf %12, %14 : vector<1x128xf32>
    %16 = arith.negf %15 : vector<1x128xf32>
    %17 = math.exp %16 : vector<1x128xf32>
    %cst_11 = arith.constant 1.000000e+00 : f32
    %18 = vector.broadcast %cst_11 : f32 to vector<1x128xf32>
    %19 = arith.addf %18, %17 : vector<1x128xf32>
    %20 = arith.divf %18, %19 : vector<1x128xf32>
    %c0_12 = arith.constant 0 : index
    %c0_13 = arith.constant 0 : index
    %21 = vector.load %arg6[%c0_12, %c0_13] : memref<1x128xf32, #tpu.memory_space<vmem>>, vector<1x128xf32>
    tpu.vector_store %arg6[%c0_12, %c0_13], %20 {strides = array<i32>} : memref<1x128xf32, #tpu.memory_space<vmem>>, vector<1x128xf32>,
    return
  }
  func.func @transform_0(%arg0: i32) -> (i32, i32) {
    %c0_i32 = arith.constant 0 : i32
    %c0_i32_0 = arith.constant 0 : i32
    return %c0_i32, %arg0 : i32, i32
  }
  func.func @transform_1(%arg0: i32) -> (i32, i32) {
    %c0_i32 = arith.constant 0 : i32
    %c0_i32_0 = arith.constant 0 : i32
    %c0_i32_1 = arith.constant 0 : i32
    return %c0_i32, %c0_i32_0 : i32, i32
  }
  func.func @transform_2(%arg0: i32) -> (i32, i32) {
    %c0_i32 = arith.constant 0 : i32
    %c0_i32_0 = arith.constant 0 : i32
    %c0_i32_1 = arith.constant 0 : i32
    return %c0_i32, %c0_i32_0 : i32, i32
  }
  func.func @transform_3(%arg0: i32) -> (i32, i32) {
    %c0_i32 = arith.constant 0 : i32
    %c0_i32_0 = arith.constant 0 : i32
    %c0_i32_1 = arith.constant 0 : i32
    return %c0_i32, %c0_i32_0 : i32, i32
  }
  func.func @transform_4(%arg0: i32) -> (i32, i32) {
    %c0_i32 = arith.constant 0 : i32
    %c0_i32_0 = arith.constant 0 : i32
    %c0_i32_1 = arith.constant 0 : i32
    return %c0_i32, %c0_i32_0 : i32, i32
  }
  func.func @transform_5(%arg0: i32) -> (i32, i32) {
    %c0_i32 = arith.constant 0 : i32
    %c0_i32_0 = arith.constant 0 : i32
    return %c0_i32, %arg0 : i32, i32
  }
}

</mosaic_0001>

<llo_original>
// kernel: tpu_custom_call.1
$region0: #{tpu_custom_call.1}
  #allocation0 [shape = 'u32[]', space=smem, size = 0x4, offset = 0x4, fixed_abs, tag = 'smem constant byte address 0x4 - core index']
  #allocation1 [shape = 'u32[144,128]{1,0:T(1,128)}', space=vmem, size = 0x12000, scoped, tag = 'internal scratch']
  #allocation2 [shape = 'f32[1,1]{1,0:T(1,128)S(1)}', space=vmem, size = 0x200, scoped, tag = 'scoped memory for tpu_custom_call.1']
  %s0 = inlined_call_operand.vmem [shape: bf16[32,128], index: 0, kind: input, shape index: {}]
  %s1 = inlined_call_operand.vmem [shape: bf16[16,32], index: 1, kind: input, shape index: {}]
  %s2 = inlined_call_operand.vmem [shape: f32[16,1], index: 2, kind: input, shape index: {}]
  %s3 = inlined_call_operand.vmem [shape: f32[16,1], index: 3, kind: input, shape index: {}]
  %s4 = inlined_call_operand.<no memory space> [shape: f32[1,1], index: 4, kind: input, shape index: {}]
  %s5 = inlined_call_operand.hbm [shape: f32[1,128], index: 5, kind: output, shape index: {}]
  %s6 = sld [smem:[#allocation0]]
  $region30: #{tpu_custom_call.1} parent=0
    _
  %s8 = ssub.s32 1, %s6
  %s9 = scalar_select 0, %s8, %s6
  %v10 = vstv %s4
  %11 = vst [vmem:[#allocation2] sm:$0x1] %v10
  $region1: #{tpu_custom_call.1} parent=0
    #allocation3 [shape = 'u8[512]{0}', space=vmem, size = 0x400, scoped, tag = 'output window, operand 0, single buffered']
    #allocation4 [shape = 's32[1]{0}', space=sflag, size = 0x4, scoped, tag = 'scoped memory for tpu_custom_call.1']
    %12 = vsyncpa [#allocation4], 0
    // Predicated region
    $region2: #{tpu_custom_call.1} parent=1 // pred_check
      _
    $region3: #{tpu_custom_call.1} parent=1 // pred_check_branch
      %14 = sbr.rel (0) target = $region5
    $region4: #{tpu_custom_call.1} parent=1 // pred_region
      _
    $region5: #{tpu_custom_call.1} parent=1 // pred_fallthru
      _
    // Predicated region
    $region6: #{tpu_custom_call.1} parent=1 // pred_check
      _
    $region7: #{tpu_custom_call.1} parent=1 // pred_check_branch
      %16 = sbr.rel (0) target = $region9
    $region8: #{tpu_custom_call.1} parent=1 // pred_region
      _
    $region9: #{tpu_custom_call.1} parent=1 // pred_fallthru
      _
    // Predicated region
    $region10: #{tpu_custom_call.1} parent=1 // pred_check
      _
    $region11: #{tpu_custom_call.1} parent=1 // pred_check_branch
      %18 = sbr.rel (0) target = $region13
    $region12: #{tpu_custom_call.1} parent=1 // pred_region
      _
    $region13: #{tpu_custom_call.1} parent=1 // pred_fallthru
      _
    // Predicated region
    $region14: #{tpu_custom_call.1} parent=1 // pred_check
      _
    $region15: #{tpu_custom_call.1} parent=1 // pred_check_branch
      %20 = sbr.rel (0) target = $region17
    $region16: #{tpu_custom_call.1} parent=1 // pred_region
      _
    $region17: #{tpu_custom_call.1} parent=1 // pred_fallthru
      _
    // Predicated region
    $region18: #{tpu_custom_call.1} parent=1 // pred_check
      _
    $region19: #{tpu_custom_call.1} parent=1 // pred_check_branch
      %22 = sbr.rel (0) target = $region21
    $region20: #{tpu_custom_call.1} parent=1 // pred_region
      _
    $region21: #{tpu_custom_call.1} parent=1 // pred_fallthru
      _
    %v24 = vld [vmem:[%s1] sm:$0xf]
    %v25 = vld [vmem:[%s1 + $0x4] sm:$0xf]
    %v26 = vld [vmem:[%s0] sm:$0xf]
    %v27 = vld [vmem:[%s0 + $0x4] sm:$0xf]
    %v28 = vld [vmem:[%s0 + $0x8] sm:$0xf]
    %v29 = vld [vmem:[%s0 + $0xc] sm:$0xf]
    %v30 = vld [vmem:[%s2] sm:$0xff]
    %v31 = vld [vmem:[%s2 + $0x8] sm:$0xff]
    %33 = vset.pattern.permute.xlu0 0
    %34 = vperm.xlu0 %33, %v30
    %v35 = vpop.permute.xlu0 %34
    %38 = vset.pattern.permute.xlu0 0
    %39 = vperm.xlu0 %38, %v31
    %v40 = vpop.permute.xlu0 %39
    %v44 = vunpack.c.l.b16 %v24
    %v45 = vunpack.c.l.b16 %v25
    %v46 = vpack.c.b16 %v45, %v44
    %v51 = vunpack.c.l.b16 %v26
    %v52 = vunpack.c.l.b16 %v27
    %v53 = vunpack.c.l.b16 %v28
    %v54 = vunpack.c.l.b16 %v29
    %v55 = vpack.c.b16 %v52, %v51
    %v56 = vpack.c.b16 %v54, %v53
    %vm59 = vcmask 261120
    %v61 = vsel %vm59, %v46, 0
    %63 = vmatprep.subr.bf16.mxu0 0
    %64 = vmatpush1.bf16.msra.mxu0 %v55
    %65 = vmatprep.subr.bf16.mxu0 0
    %66 = vmatpush1.bf16.msra.mxu0 %v56
    %67 = vmatprep.subr.bf16.mxu0 0
    %68 = vmatpush1.bf16.msra.mxu0 0
    %69 = vmatprep.subr.bf16.mxu0 0
    %70 = vmatpush1.bf16.msra.mxu0 0
    %71 = vmatprep.subr.bf16.mxu0 0
    %72 = vmatpush1.bf16.msra.mxu0 0
    %73 = vmatprep.subr.bf16.mxu0 0
    %74 = vmatpush1.bf16.msra.mxu0 0
    %75 = vmatprep.subr.bf16.mxu0 0
    %76 = vmatpush1.bf16.msra.mxu0 0
    %77 = vmatprep.subr.bf16.mxu0 0
    %78 = vmatpush1.bf16.msra.mxu0 0
    %79 = vmatprep.subr.bf16.mxu0 0
    %80 = vmatpush1.bf16.msra.mxu0 0
    %81 = vmatprep.subr.bf16.mxu0 0
    %82 = vmatpush1.bf16.msra.mxu0 0
    %83 = vmatprep.subr.bf16.mxu0 0
    %84 = vmatpush1.bf16.msra.mxu0 0
    %85 = vmatprep.subr.bf16.mxu0 0
    %86 = vmatpush1.bf16.msra.mxu0 0
    %87 = vmatprep.subr.bf16.mxu0 0
    %88 = vmatpush1.bf16.msra.mxu0 0
    %89 = vmatprep.subr.bf16.mxu0 0
    %90 = vmatpush1.bf16.msra.mxu0 0
    %91 = vmatprep.subr.bf16.mxu0 0
    %92 = vmatpush1.bf16.msra.mxu0 0
    %93 = vmatprep.subr.bf16.mxu0 0
    %94 = vmatpush1.bf16.msra.mxu0 0
    %95 = vmatprep.mubr.bf16.mxu0 0
    %96 = vmatmul.mubr.bf16.gmra.mrb[0].mxu0 %v61
    %v97 = vpop.f32.mrb[0].mxu0
    %v98 = vadd.f32 %v35, %v97
    %v99 = vpop.f32.mrb[0].mxu0
    %v100 = vpop.f32.mrb[0].mxu0
    %v101 = vadd.f32 %v40, %v100
    %v102 = vpop.f32.mrb[0].mxu0
    %103 = vdwg.mxu0
    %v104 = vmax.f32 %v98, 0.0
    %v105 = vmax.f32 %v101, 0.0
    %v106 = vld [vmem:[%s3] sm:$0xff]
    %v107 = vld [vmem:[%s3 + $0x8] sm:$0xff]
    %109 = vset.pattern.permute.xlu0 0
    %110 = vperm.xlu0 %109, %v106
    %v111 = vpop.permute.xlu0 %110
    %114 = vset.pattern.permute.xlu0 0
    %115 = vperm.xlu0 %114, %v107
    %v116 = vpop.permute.xlu0 %115
    %v118 = vmul.f32 %v104, %v111
    %v119 = vmul.f32 %v105, %v116
    %v120 = vadd.f32 %v118, %v119
    %v121 = vrot.slane %v120, 4
    %v122 = vadd.f32 %v120, %v121
    %v123 = vrot.slane %v122, 2
    %v124 = vadd.f32 %v122, %v123
    %v125 = vrot.slane %v124, 1
    %v126 = vadd.f32 %v124, %v125
    %v127 = vld [vmem:[#allocation2] sm:$0x1]
    %129 = vset.pattern.permute.xlu0 0
    %130 = vperm.xlu0 %129, %v127
    %v131 = vpop.permute.xlu0 %130
    %v133 = vlaneseq
    %v134 = vshrl.u32 %v133, 7
    %v135 = vsub.s32 0, %v134
    %v136 = vrot.slane %v131, %v135
    %v137 = vadd.f32 %v126, %v136
    %v138 = vxor.u32 %v137, 2147483648
    %v139 = vmul.f32 %v138, 1.442695
    %v140 = vpow.pop %v139
    %v141 = vadd.f32 %v140, 1.0
    %v142 = vrcp.pop %v141
    %v143 = vmul.f32 1.0, %v142
    %144 = vst [vmem:[#allocation3] sm:$0x1] %v143
    // Predicated region
    $region22: #{tpu_custom_call.1} parent=1 // pred_check
      _
    $region23: #{tpu_custom_call.1} parent=1 // pred_check_branch
      %146 = sbr.rel (0) target = $region25
    $region24: #{tpu_custom_call.1} parent=1 // pred_region
      %s148 = ssub.s32 16, 16
      %149 = vsyncadd [#allocation4], %s148
      %s151 = sshll.u32 [#allocation3], 4
      %s152 = int_to_ptr.vmem [resolvable:$true] %s151
      %154 = dma.vmem_to_hbm [thread:$0]  %s152, 16, %s5, [#allocation4]
    $region25: #{tpu_custom_call.1} parent=1 // pred_fallthru
      _
    // Predicated region
    $region26: #{tpu_custom_call.1} parent=1 // pred_check
      _
    $region27: #{tpu_custom_call.1} parent=1 // pred_check_branch
      %156 = sbr.rel (0) target = $region29
    $region28: #{tpu_custom_call.1} parent=1 // pred_region
      %157 = dma.done [#allocation4], 16
    $region29: #{tpu_custom_call.1} parent=1 // pred_fallthru
      _
    %158 = vsyncpa [#allocation4], 1

</llo_original>
